<compile_context>
chip_gen: v7x
topology: tpu7x:2x2x1
jax: 0.10.0
libtpu: 0.0.40
codegen_flags: <defaults>
</compile_context>

<pallas_src>
import functools

import jax
import jax.numpy as jnp
from jax.experimental import pallas as pl
from jax.experimental.pallas import tpu as pltpu


def _make_mlp_kernel(n_hidden_layers: int):
    """Kernel closure over the (static) number of hidden layers.

    Ref layout: (u_ref, i_ref, w1_u, w1_i, b1, w2, b2, ..., wn, bn,
                 w_out_col, b_out, out_ref)
    Weights are in torch Linear layout (out, in); biases are (out, 1) columns.
    Activations are (features, batch_tile) with batch in the lane dim.
    """

    def kernel(u_ref, i_ref, *refs):
        out_ref = refs[-1]

        # --- first layer: concat(user, item) @ W1^T done as two dots ---
        w1_u = refs[0][...]                       # (H1, E)
        w1_i = refs[1][...]                       # (H1, E)
        b1 = refs[2][...]                         # (H1, 1)
        h = jnp.dot(w1_u, u_ref[...], preferred_element_type=jnp.float32)
        h = h + jnp.dot(w1_i, i_ref[...], preferred_element_type=jnp.float32)
        h = jnp.maximum(h + b1, 0.0)              # ReLU
        # Dropout(0.2): identity in eval mode.

        idx = 3
        for _ in range(n_hidden_layers - 1):
            w = refs[idx][...]                    # (H_out, H_in)
            b = refs[idx + 1][...]                # (H_out, 1)
            idx += 2
            h = jnp.dot(w, h, preferred_element_type=jnp.float32) + b
            h = jnp.maximum(h, 0.0)               # ReLU (dropout = identity)

        # --- output head: (last_hidden -> 1) as VPU mul + sublane reduce ---
        w_o_col = refs[idx][...]                  # (last_hidden, 1)
        b_o = refs[idx + 1][...]                  # (1, 1)
        logits = jnp.sum(h * w_o_col, axis=0, keepdims=True) + b_o  # (1, tile)
        out_ref[...] = jax.nn.sigmoid(logits)     # lane-dense (1, batch_tile)

    return kernel


def neural_cf_forward(user_input, item_input, params, *, batch_tile=512):
    """Forward pass matching NeuralCF.forward (eval mode). Returns (B,)."""
    user_emb_tbl = params["user_embedding"]       # (num_users, E) f32
    item_emb_tbl = params["item_embedding"]       # (num_items, E) f32
    hidden = params["hidden"]                     # list of (W (out,in), b (out,1))
    w_out, b_out = params["output"]               # (1, last), (1, 1)

    assert len(hidden) >= 1, "need at least one hidden layer"
    assert batch_tile % 128 == 0, "batch_tile must be a multiple of 128 lanes"

    E = user_emb_tbl.shape[1]
    B = user_input.shape[0]

    # Pad the batch up to a tile multiple (filler index 0; sliced off at end).
    n_tiles = pl.cdiv(B, batch_tile)
    B_pad = n_tiles * batch_tile
    pad = B_pad - B
    uidx = jnp.pad(user_input, (0, pad))
    iidx = jnp.pad(item_input, (0, pad))

    # Glue: embedding lookups, transposed so batch lands in the lane dimension.
    # XLA fuses the transpose into the gather's output layout.
    u_t = jnp.take(user_emb_tbl, uidx, axis=0).T  # (E, B_pad)
    i_t = jnp.take(item_emb_tbl, iidx, axis=0).T  # (E, B_pad)

    # Split the first hidden weight (H1, 2E) into user/item halves -> no concat.
    w1, b1 = hidden[0]
    w1_u = w1[:, :E]
    w1_i = w1[:, E:]

    flat_params = [w1_u, w1_i, b1]
    for w, b in hidden[1:]:
        flat_params += [w, b]
    flat_params += [w_out.T, b_out]               # head weight as a column

    in_specs = [
        pl.BlockSpec((E, batch_tile), lambda i: (0, i)),   # user embeddings
        pl.BlockSpec((E, batch_tile), lambda i: (0, i)),   # item embeddings
    ] + [
        # Constant block index -> grid-invariant, DMA'd once, resident in VMEM.
        pl.BlockSpec(p.shape, lambda i: (0, 0)) for p in flat_params
    ]
    out_spec = pl.BlockSpec((1, batch_tile), lambda i: (0, i))

    out = pl.pallas_call(
        _make_mlp_kernel(len(hidden)),
        out_shape=jax.ShapeDtypeStruct((1, B_pad), jnp.float32),
        grid_spec=pltpu.PrefetchScalarGridSpec(
            num_scalar_prefetch=0,
            grid=(n_tiles,),
            in_specs=in_specs,
            out_specs=out_spec,
        ),
        compiler_params=pltpu.CompilerParams(
            dimension_semantics=("parallel",),    # batch tiles -> megacore
        ),
    )(u_t, i_t, *flat_params)

    # torch: output.squeeze() -> (B,)
    return out[0, :B]


def init_params(key, num_users, num_items, embedding_dim, layers):
    """Deterministic synthetic init; shapes match the torch module (W: out,in)."""
    keys = jax.random.split(key, 2 + 2 * (len(layers) + 1))
    k_iter = iter(keys)

    params = {
        "user_embedding": jax.random.normal(
            next(k_iter), (num_users, embedding_dim), jnp.float32) * 0.1,
        "item_embedding": jax.random.normal(
            next(k_iter), (num_items, embedding_dim), jnp.float32) * 0.1,
    }

    layer_dims = [embedding_dim * 2] + list(layers)
    hidden = []
    for i in range(len(layer_dims) - 1):
        fan_in, fan_out = layer_dims[i], layer_dims[i + 1]
        w = jax.random.normal(next(k_iter), (fan_out, fan_in), jnp.float32) * (
            1.0 / jnp.sqrt(fan_in))
        b = jax.random.normal(next(k_iter), (fan_out, 1), jnp.float32) * 0.01
        hidden.append((w, b))
    params["hidden"] = hidden

    fan_in = layer_dims[-1]
    w_o = jax.random.normal(next(k_iter), (1, fan_in), jnp.float32) * (
        1.0 / jnp.sqrt(fan_in))
    b_o = jax.random.normal(next(k_iter), (1, 1), jnp.float32) * 0.01
    params["output"] = (w_o, b_o)
    return params


def _reference_forward(user_input, item_input, params):
    """Pure-JAX reference matching the torch forward (eval mode)."""
    u = jnp.take(params["user_embedding"], user_input, axis=0)
    it = jnp.take(params["item_embedding"], item_input, axis=0)
    x = jnp.concatenate([u, it], axis=-1)
    for w, b in params["hidden"]:
        x = jnp.maximum(x @ w.T + b[:, 0], 0.0)
    w_o, b_o = params["output"]
    return jax.nn.sigmoid(x @ w_o.T + b_o[:, 0])[:, 0]


if __name__ == "__main__":
    num_users = 32
    num_items = 48
    embedding_dim = 16
    layers = [64, 32]
    batch = 300   # deliberately not tile-aligned: exercises the padding path

    key = jax.random.PRNGKey(0)
    k_params, k_user, k_item = jax.random.split(key, 3)

    params = init_params(k_params, num_users, num_items, embedding_dim, layers)
    user_input = jax.random.randint(k_user, (batch,), 0, num_users, dtype=jnp.int32)
    item_input = jax.random.randint(k_item, (batch,), 0, num_items, dtype=jnp.int32)

    fwd = jax.jit(functools.partial(neural_cf_forward, batch_tile=512))
    out = fwd(user_input, item_input, params)
    out = jax.block_until_ready(out)

    ref = _reference_forward(user_input, item_input, params)

    assert out.shape == (batch,), out.shape
    assert bool(jnp.all(jnp.isfinite(out)))
    assert bool(jnp.all((out >= 0.0) & (out <= 1.0)))
    assert bool(jnp.allclose(out, ref, rtol=1e-5, atol=1e-5)), float(
        jnp.max(jnp.abs(out - ref)))
    print("KERNEL_OK")
</pallas_src>

<mosaic_0001>
module attributes {stable_mosaic.version = 11 : i64} {
  func.func @kernel(%arg0: i32, %arg1: memref<16x512xf32, #tpu.memory_space<vmem>>, %arg2: memref<16x512xf32, #tpu.memory_space<vmem>>, %arg3: memref<64x16xf32, #tpu.memory_space<vmem>>, %arg4: memref<64x16xf32, #tpu.memory_space<vmem>>, %arg5: memref<64x1xf32, #tpu.memory_space<vmem>>, %arg6: memref<32x64xf32, #tpu.memory_space<vmem>>, %arg7: memref<32x1xf32, #tpu.memory_space<vmem>>, %arg8: memref<32x1xf32, #tpu.memory_space<vmem>>, %arg9: memref<1x1xf32, #tpu.memory_space<vmem>>, %arg10: memref<1x512xf32, #tpu.memory_space<vmem>>) attributes {dimension_semantics = [#tpu.dimension_semantics<parallel>], iteration_bounds = array<i64: 1>, scalar_prefetch = 0 : i64, scratch_operands = 0 : i64, tpu.core_type = #tpu.core_type<tc>, window_params = [{transform_indices = @transform_0, window_bounds = array<i64: 16, 512>}, {transform_indices = @transform_1, window_bounds = array<i64: 16, 512>}, {pipeline_mode = #tpu.pipeline_mode<synchronous>, transform_indices = @transform_2, window_bounds = array<i64: 64, 16>}, {pipeline_mode = #tpu.pipeline_mode<synchronous>, transform_indices = @transform_3, window_bounds = array<i64: 64, 16>}, {pipeline_mode = #tpu.pipeline_mode<synchronous>, transform_indices = @transform_4, window_bounds = array<i64: 64, 1>}, {pipeline_mode = #tpu.pipeline_mode<synchronous>, transform_indices = @transform_5, window_bounds = array<i64: 32, 64>}, {pipeline_mode = #tpu.pipeline_mode<synchronous>, transform_indices = @transform_6, window_bounds = array<i64: 32, 1>}, {pipeline_mode = #tpu.pipeline_mode<synchronous>, transform_indices = @transform_7, window_bounds = array<i64: 32, 1>}, {pipeline_mode = #tpu.pipeline_mode<synchronous>, transform_indices = @transform_8, window_bounds = array<i64: 1, 1>}, {transform_indices = @transform_9, window_bounds = array<i64: 1, 512>}]} {
    %c0 = arith.constant 0 : index
    %c0_0 = arith.constant 0 : index
    %0 = vector.load %arg3[%c0, %c0_0] : memref<64x16xf32, #tpu.memory_space<vmem>>, vector<64x16xf32>
    %c0_1 = arith.constant 0 : index
    %c0_2 = arith.constant 0 : index
    %1 = vector.load %arg4[%c0_1, %c0_2] : memref<64x16xf32, #tpu.memory_space<vmem>>, vector<64x16xf32>
    %c0_3 = arith.constant 0 : index
    %c0_4 = arith.constant 0 : index
    %2 = vector.load %arg5[%c0_3, %c0_4] : memref<64x1xf32, #tpu.memory_space<vmem>>, vector<64x1xf32>
    %c0_5 = arith.constant 0 : index
    %c0_6 = arith.constant 0 : index
    %3 = vector.load %arg1[%c0_5, %c0_6] : memref<16x512xf32, #tpu.memory_space<vmem>>, vector<16x512xf32>
    %cst = arith.constant dense<0.000000e+00> : vector<64x512xf32>
    %4 = tpu.matmul %0, %3, %cst {dimension_numbers = #tpu.dot_dimension_numbers<[1], [0], [0], [1], [0, 0, 1, 1], [], []>} : vector<64x16xf32>, vector<16x512xf32>, vector<64x512xf32> -> vector<64x512xf32>
    %c0_7 = arith.constant 0 : index
    %c0_8 = arith.constant 0 : index
    %5 = vector.load %arg2[%c0_7, %c0_8] : memref<16x512xf32, #tpu.memory_space<vmem>>, vector<16x512xf32>
    %cst_9 = arith.constant dense<0.000000e+00> : vector<64x512xf32>
    %6 = tpu.matmul %1, %5, %cst_9 {dimension_numbers = #tpu.dot_dimension_numbers<[1], [0], [0], [1], [0, 0, 1, 1], [], []>} : vector<64x16xf32>, vector<16x512xf32>, vector<64x512xf32> -> vector<64x512xf32>
    %7 = arith.addf %4, %6 : vector<64x512xf32>
    %8 = vector.broadcast %2 : vector<64x1xf32> to vector<64x512xf32>
    %9 = arith.addf %7, %8 : vector<64x512xf32>
    %cst_10 = arith.constant 0.000000e+00 : f32
    %10 = vector.broadcast %cst_10 : f32 to vector<64x512xf32>
    %11 = arith.maximumf %9, %10 : vector<64x512xf32>
    %c0_11 = arith.constant 0 : index
    %c0_12 = arith.constant 0 : index
    %12 = vector.load %arg6[%c0_11, %c0_12] : memref<32x64xf32, #tpu.memory_space<vmem>>, vector<32x64xf32>
    %c0_13 = arith.constant 0 : index
    %c0_14 = arith.constant 0 : index
    %13 = vector.load %arg7[%c0_13, %c0_14] : memref<32x1xf32, #tpu.memory_space<vmem>>, vector<32x1xf32>
    %cst_15 = arith.constant dense<0.000000e+00> : vector<32x512xf32>
    %14 = tpu.matmul %12, %11, %cst_15 {dimension_numbers = #tpu.dot_dimension_numbers<[1], [0], [0], [1], [0, 0, 1, 1], [], []>} : vector<32x64xf32>, vector<64x512xf32>, vector<32x512xf32> -> vector<32x512xf32>
    %15 = vector.broadcast %13 : vector<32x1xf32> to vector<32x512xf32>
    %16 = arith.addf %14, %15 : vector<32x512xf32>
    %cst_16 = arith.constant 0.000000e+00 : f32
    %17 = vector.broadcast %cst_16 : f32 to vector<32x512xf32>
    %18 = arith.maximumf %16, %17 : vector<32x512xf32>
    %c0_17 = arith.constant 0 : index
    %c0_18 = arith.constant 0 : index
    %19 = vector.load %arg8[%c0_17, %c0_18] : memref<32x1xf32, #tpu.memory_space<vmem>>, vector<32x1xf32>
    %c0_19 = arith.constant 0 : index
    %c0_20 = arith.constant 0 : index
    %20 = vector.load %arg9[%c0_19, %c0_20] : memref<1x1xf32, #tpu.memory_space<vmem>>, vector<1x1xf32>
    %21 = vector.broadcast %19 : vector<32x1xf32> to vector<32x512xf32>
    %22 = arith.mulf %18, %21 : vector<32x512xf32>
    %cst_21 = arith.constant dense<0.000000e+00> : vector<512xf32>
    %23 = vector.multi_reduction <add>, %22, %cst_21 [0] : vector<32x512xf32> to vector<512xf32>
    %24 = vector.shape_cast %23 : vector<512xf32> to vector<1x512xf32>
    %25 = vector.broadcast %20 : vector<1x1xf32> to vector<1x512xf32>
    %26 = arith.addf %24, %25 : vector<1x512xf32>
    %27 = arith.negf %26 : vector<1x512xf32>
    %28 = math.exp %27 : vector<1x512xf32>
    %cst_22 = arith.constant 1.000000e+00 : f32
    %29 = vector.broadcast %cst_22 : f32 to vector<1x512xf32>
    %30 = arith.addf %29, %28 : vector<1x512xf32>
    %31 = arith.divf %29, %30 : vector<1x512xf32>
    %c0_23 = arith.constant 0 : index
    %c0_24 = arith.constant 0 : index
    %32 = vector.load %arg10[%c0_23, %c0_24] : memref<1x512xf32, #tpu.memory_space<vmem>>, vector<1x512xf32>
    tpu.vector_store %arg10[%c0_23, %c0_24], %31 {strides = array<i32>} : memref<1x512xf32, #tpu.memory_space<vmem>>, vector<1x512xf32>,
    return
  }
  func.func @transform_0(%arg0: i32) -> (i32, i32) {
    %c0_i32 = arith.constant 0 : i32
    %c0_i32_0 = arith.constant 0 : i32
    return %c0_i32, %arg0 : i32, i32
  }
  func.func @transform_1(%arg0: i32) -> (i32, i32) {
    %c0_i32 = arith.constant 0 : i32
    %c0_i32_0 = arith.constant 0 : i32
    return %c0_i32, %arg0 : i32, i32
  }
  func.func @transform_2(%arg0: i32) -> (i32, i32) {
    %c0_i32 = arith.constant 0 : i32
    %c0_i32_0 = arith.constant 0 : i32
    %c0_i32_1 = arith.constant 0 : i32
    return %c0_i32, %c0_i32_0 : i32, i32
  }
  func.func @transform_3(%arg0: i32) -> (i32, i32) {
    %c0_i32 = arith.constant 0 : i32
    %c0_i32_0 = arith.constant 0 : i32
    %c0_i32_1 = arith.constant 0 : i32
    return %c0_i32, %c0_i32_0 : i32, i32
  }
  func.func @transform_4(%arg0: i32) -> (i32, i32) {
    %c0_i32 = arith.constant 0 : i32
    %c0_i32_0 = arith.constant 0 : i32
    %c0_i32_1 = arith.constant 0 : i32
    return %c0_i32, %c0_i32_0 : i32, i32
  }
  func.func @transform_5(%arg0: i32) -> (i32, i32) {
    %c0_i32 = arith.constant 0 : i32
    %c0_i32_0 = arith.constant 0 : i32
    %c0_i32_1 = arith.constant 0 : i32
    return %c0_i32, %c0_i32_0 : i32, i32
  }
  func.func @transform_6(%arg0: i32) -> (i32, i32) {
    %c0_i32 = arith.constant 0 : i32
    %c0_i32_0 = arith.constant 0 : i32
    %c0_i32_1 = arith.constant 0 : i32
    return %c0_i32, %c0_i32_0 : i32, i32
  }
  func.func @transform_7(%arg0: i32) -> (i32, i32) {
    %c0_i32 = arith.constant 0 : i32
    %c0_i32_0 = arith.constant 0 : i32
    %c0_i32_1 = arith.constant 0 : i32
    return %c0_i32, %c0_i32_0 : i32, i32
  }
  func.func @transform_8(%arg0: i32) -> (i32, i32) {
    %c0_i32 = arith.constant 0 : i32
    %c0_i32_0 = arith.constant 0 : i32
    %c0_i32_1 = arith.constant 0 : i32
    return %c0_i32, %c0_i32_0 : i32, i32
  }
  func.func @transform_9(%arg0: i32) -> (i32, i32) {
    %c0_i32 = arith.constant 0 : i32
    %c0_i32_0 = arith.constant 0 : i32
    return %c0_i32, %arg0 : i32, i32
  }
}

</mosaic_0001>

<llo_original>
// kernel: neural_cf_forward.1
$region0: #{neural_cf_forward.1}
  #allocation0 [shape = 'u32[]', space=smem, size = 0x4, offset = 0x4, fixed_abs, tag = 'smem constant byte address 0x4 - core index']
  #allocation1 [shape = 'u32[144,128]{1,0:T(1,128)}', space=vmem, size = 0x12000, scoped, tag = 'internal scratch']
  #allocation2 [shape = 'f32[1,1]{1,0:T(1,128)S(1)}', space=vmem, size = 0x200, scoped, tag = 'scoped memory for neural_cf_forward.1']
  %s0 = inlined_call_operand.vmem [shape: f32[16,512], index: 0, kind: input, shape index: {}]
  %s1 = inlined_call_operand.vmem [shape: f32[16,512], index: 1, kind: input, shape index: {}]
  %s2 = inlined_call_operand.vmem [shape: f32[64,16], index: 2, kind: input, shape index: {}]
  %s3 = inlined_call_operand.vmem [shape: f32[64,16], index: 3, kind: input, shape index: {}]
  %s4 = inlined_call_operand.vmem [shape: f32[64,1], index: 4, kind: input, shape index: {}]
  %s5 = inlined_call_operand.vmem [shape: f32[32,64], index: 5, kind: input, shape index: {}]
  %s6 = inlined_call_operand.vmem [shape: f32[32,1], index: 6, kind: input, shape index: {}]
  %s7 = inlined_call_operand.vmem [shape: f32[32,1], index: 7, kind: input, shape index: {}]
  %s8 = inlined_call_operand.<no memory space> [shape: f32[1,1], index: 8, kind: input, shape index: {}]
  %s9 = inlined_call_operand.vmem [shape: f32[1,512], index: 9, kind: output, shape index: {}]
  %s10 = sld [smem:[#allocation0]]
  $region46: #{neural_cf_forward.1} parent=0
    _
  %s12 = ssub.s32 1, %s10
  %s13 = scalar_select 0, %s12, %s10
  %v14 = vstv %s8
  %15 = vst [vmem:[#allocation2] sm:$0x1] %v14
  // Predicated region
  $region2: #{neural_cf_forward.1} parent=0 // pred_check
    _
  $region3: #{neural_cf_forward.1} parent=0 // pred_check_branch
    %17 = sbr.rel (0) target = $region5
  $region4: #{neural_cf_forward.1} parent=0 // pred_region
    _
  $region5: #{neural_cf_forward.1} parent=0 // pred_fallthru
    _
  // Predicated region
  $region6: #{neural_cf_forward.1} parent=0 // pred_check
    _
  $region7: #{neural_cf_forward.1} parent=0 // pred_check_branch
    %19 = sbr.rel (0) target = $region9
  $region8: #{neural_cf_forward.1} parent=0 // pred_region
    _
  $region9: #{neural_cf_forward.1} parent=0 // pred_fallthru
    _
  // Predicated region
  $region10: #{neural_cf_forward.1} parent=0 // pred_check
    _
  $region11: #{neural_cf_forward.1} parent=0 // pred_check_branch
    %21 = sbr.rel (0) target = $region13
  $region12: #{neural_cf_forward.1} parent=0 // pred_region
    _
  $region13: #{neural_cf_forward.1} parent=0 // pred_fallthru
    _
  // Predicated region
  $region14: #{neural_cf_forward.1} parent=0 // pred_check
    _
  $region15: #{neural_cf_forward.1} parent=0 // pred_check_branch
    %23 = sbr.rel (0) target = $region17
  $region16: #{neural_cf_forward.1} parent=0 // pred_region
    _
  $region17: #{neural_cf_forward.1} parent=0 // pred_fallthru
    _
  // Predicated region
  $region18: #{neural_cf_forward.1} parent=0 // pred_check
    _
  $region19: #{neural_cf_forward.1} parent=0 // pred_check_branch
    %25 = sbr.rel (0) target = $region21
  $region20: #{neural_cf_forward.1} parent=0 // pred_region
    _
  $region21: #{neural_cf_forward.1} parent=0 // pred_fallthru
    _
  // Predicated region
  $region22: #{neural_cf_forward.1} parent=0 // pred_check
    _
  $region23: #{neural_cf_forward.1} parent=0 // pred_check_branch
    %27 = sbr.rel (0) target = $region25
  $region24: #{neural_cf_forward.1} parent=0 // pred_region
    _
  $region25: #{neural_cf_forward.1} parent=0 // pred_fallthru
    _
  // Predicated region
  $region26: #{neural_cf_forward.1} parent=0 // pred_check
    _
  $region27: #{neural_cf_forward.1} parent=0 // pred_check_branch
    %29 = sbr.rel (0) target = $region29
  $region28: #{neural_cf_forward.1} parent=0 // pred_region
    _
  $region29: #{neural_cf_forward.1} parent=0 // pred_fallthru
    _
  // Predicated region
  $region30: #{neural_cf_forward.1} parent=0 // pred_check
    _
  $region31: #{neural_cf_forward.1} parent=0 // pred_check_branch
    %31 = sbr.rel (0) target = $region33
  $region32: #{neural_cf_forward.1} parent=0 // pred_region
    _
  $region33: #{neural_cf_forward.1} parent=0 // pred_fallthru
    _
  // Predicated region
  $region34: #{neural_cf_forward.1} parent=0 // pred_check
    _
  $region35: #{neural_cf_forward.1} parent=0 // pred_check_branch
    %33 = sbr.rel (0) target = $region37
  $region36: #{neural_cf_forward.1} parent=0 // pred_region
    _
  $region37: #{neural_cf_forward.1} parent=0 // pred_fallthru
    _
  %v34 = vld [vmem:[%s2] sm:$0xff]
  %v35 = vld [vmem:[%s2 + $0x8] sm:$0xff]
  %v36 = vld [vmem:[%s2 + $0x10] sm:$0xff]
  %v37 = vld [vmem:[%s2 + $0x18] sm:$0xff]
  %v38 = vld [vmem:[%s2 + $0x20] sm:$0xff]
  %v39 = vld [vmem:[%s2 + $0x28] sm:$0xff]
  %v40 = vld [vmem:[%s2 + $0x30] sm:$0xff]
  %v41 = vld [vmem:[%s2 + $0x38] sm:$0xff]
  %v42 = vld [vmem:[%s3] sm:$0xff]
  %v43 = vld [vmem:[%s3 + $0x8] sm:$0xff]
  %v44 = vld [vmem:[%s3 + $0x10] sm:$0xff]
  %v45 = vld [vmem:[%s3 + $0x18] sm:$0xff]
  %v46 = vld [vmem:[%s3 + $0x20] sm:$0xff]
  %v47 = vld [vmem:[%s3 + $0x28] sm:$0xff]
  %v48 = vld [vmem:[%s3 + $0x30] sm:$0xff]
  %v49 = vld [vmem:[%s3 + $0x38] sm:$0xff]
  %v50 = vld [vmem:[%s4] sm:$0xff]
  %v51 = vld [vmem:[%s4 + $0x8] sm:$0xff]
  %v52 = vld [vmem:[%s4 + $0x10] sm:$0xff]
  %v53 = vld [vmem:[%s4 + $0x18] sm:$0xff]
  %v54 = vld [vmem:[%s4 + $0x20] sm:$0xff]
  %v55 = vld [vmem:[%s4 + $0x28] sm:$0xff]
  %v56 = vld [vmem:[%s4 + $0x30] sm:$0xff]
  %v57 = vld [vmem:[%s4 + $0x38] sm:$0xff]
  %v58 = vld [vmem:[%s0] sm:$0xff]
  %v59 = vld [vmem:[%s0 + $0x8] sm:$0xff]
  %v60 = vld [vmem:[%s0 + $0x10] sm:$0xff]
  %v61 = vld [vmem:[%s0 + $0x18] sm:$0xff]
  %v62 = vld [vmem:[%s0 + $0x20] sm:$0xff]
  %v63 = vld [vmem:[%s0 + $0x28] sm:$0xff]
  %v64 = vld [vmem:[%s0 + $0x30] sm:$0xff]
  %v65 = vld [vmem:[%s0 + $0x38] sm:$0xff]
  %v66 = vld [vmem:[%s1] sm:$0xff]
  %v67 = vld [vmem:[%s1 + $0x8] sm:$0xff]
  %v68 = vld [vmem:[%s1 + $0x10] sm:$0xff]
  %v69 = vld [vmem:[%s1 + $0x18] sm:$0xff]
  %v70 = vld [vmem:[%s1 + $0x20] sm:$0xff]
  %v71 = vld [vmem:[%s1 + $0x28] sm:$0xff]
  %v72 = vld [vmem:[%s1 + $0x30] sm:$0xff]
  %v73 = vld [vmem:[%s1 + $0x38] sm:$0xff]
  %vm74 = vcmask 130048
  %v76 = vsel %vm74, %v42, 0
  %v79 = vsel %vm74, %v43, 0
  %v82 = vsel %vm74, %v44, 0
  %v85 = vsel %vm74, %v45, 0
  %v88 = vsel %vm74, %v46, 0
  %v91 = vsel %vm74, %v47, 0
  %v94 = vsel %vm74, %v48, 0
  %v97 = vsel %vm74, %v49, 0
  %99 = vmatprep.subr.mxu0 %v67
  %100 = vmatpush1.msra.mxu0 %v66
  %101 = vmatprep.subr.mxu0 %v71
  %102 = vmatpush1.msra.mxu0 %v70
  %103 = vmatprep.subr.mxu0 0.0
  %104 = vmatpush1.msra.mxu0 0.0
  %105 = vmatprep.subr.mxu0 0.0
  %106 = vmatpush1.msra.mxu0 0.0
  %107 = vmatprep.subr.mxu0 0.0
  %108 = vmatpush1.msra.mxu0 0.0
  %109 = vmatprep.subr.mxu0 0.0
  %110 = vmatpush1.msra.mxu0 0.0
  %111 = vmatprep.subr.mxu0 0.0
  %112 = vmatpush1.msra.mxu0 0.0
  %113 = vmatprep.subr.mxu0 0.0
  %114 = vmatpush1.msra.mxu0 0.0
  %115 = vmatprep.subr.mxu0 0.0
  %116 = vmatpush1.msra.mxu0 0.0
  %117 = vmatprep.subr.mxu0 0.0
  %118 = vmatpush1.msra.mxu0 0.0
  %119 = vmatprep.subr.mxu0 0.0
  %120 = vmatpush1.msra.mxu0 0.0
  %121 = vmatprep.subr.mxu0 0.0
  %122 = vmatpush1.msra.mxu0 0.0
  %123 = vmatprep.subr.mxu0 0.0
  %124 = vmatpush1.msra.mxu0 0.0
  %125 = vmatprep.subr.mxu0 0.0
  %126 = vmatpush1.msra.mxu0 0.0
  %127 = vmatprep.subr.mxu0 0.0
  %128 = vmatpush1.msra.mxu0 0.0
  %129 = vmatprep.subr.mxu0 0.0
  %130 = vmatpush1.msra.mxu0 0.0
  %131 = vmatprep.subr.mxu0 0.0
  %132 = vmatpush1.msra.mxu0 0.0
  %133 = vmatprep.subr.mxu0 0.0
  %134 = vmatpush1.msra.mxu0 0.0
  %135 = vmatprep.subr.mxu0 0.0
  %136 = vmatpush1.msra.mxu0 0.0
  %137 = vmatprep.subr.mxu0 0.0
  %138 = vmatpush1.msra.mxu0 0.0
  %139 = vmatprep.subr.mxu0 0.0
  %140 = vmatpush1.msra.mxu0 0.0
  %141 = vmatprep.subr.mxu0 0.0
  %142 = vmatpush1.msra.mxu0 0.0
  %143 = vmatprep.subr.mxu0 0.0
  %144 = vmatpush1.msra.mxu0 0.0
  %145 = vmatprep.subr.mxu0 0.0
  %146 = vmatpush1.msra.mxu0 0.0
  %147 = vmatprep.subr.mxu0 0.0
  %148 = vmatpush1.msra.mxu0 0.0
  %149 = vmatprep.subr.mxu0 0.0
  %150 = vmatpush1.msra.mxu0 0.0
  %151 = vmatprep.subr.mxu0 0.0
  %152 = vmatpush1.msra.mxu0 0.0
  %153 = vmatprep.subr.mxu0 0.0
  %154 = vmatpush1.msra.mxu0 0.0
  %155 = vmatprep.subr.mxu0 0.0
  %156 = vmatpush1.msra.mxu0 0.0
  %157 = vmatprep.subr.mxu0 0.0
  %158 = vmatpush1.msra.mxu0 0.0
  %159 = vmatprep.subr.mxu0 0.0
  %160 = vmatpush1.msra.mxu0 0.0
  %161 = vmatprep.subr.mxu0 0.0
  %162 = vmatpush1.msra.mxu0 0.0
  %163 = vmatprep.mubr.f32.mxu0 0.0
  %164 = vmatmul.mubr.f32.gmra.mrb[0].mxu0 %v76
  %v165 = vpop.f32.mrb[0].mxu0
  %v166 = vadd.f32 0.0, %v165
  %v167 = vpop.f32.mrb[0].mxu0
  %v168 = vadd.f32 0.0, %v167
  %169 = vmatprep.mubr.f32.mxu0 0.0
  %170 = vmatmul.mubr.f32.gmra.mrb[0].mxu0 %v79
  %v171 = vpop.f32.mrb[0].mxu0
  %v172 = vadd.f32 0.0, %v171
  %v173 = vpop.f32.mrb[0].mxu0
  %v174 = vadd.f32 0.0, %v173
  %175 = vmatprep.mubr.f32.mxu0 0.0
  %176 = vmatmul.mubr.f32.gmra.mrb[0].mxu0 %v82
  %v177 = vpop.f32.mrb[0].mxu0
  %v178 = vadd.f32 0.0, %v177
  %v179 = vpop.f32.mrb[0].mxu0
  %v180 = vadd.f32 0.0, %v179
  %181 = vmatprep.mubr.f32.mxu0 0.0
  %182 = vmatmul.mubr.f32.gmra.mrb[0].mxu0 %v85
  %v183 = vpop.f32.mrb[0].mxu0
  %v184 = vadd.f32 0.0, %v183
  %v185 = vpop.f32.mrb[0].mxu0
  %v186 = vadd.f32 0.0, %v185
  %187 = vmatprep.mubr.f32.mxu0 0.0
  %188 = vmatmul.mubr.f32.gmra.mrb[0].mxu0 %v88
  %v189 = vpop.f32.mrb[0].mxu0
  %v190 = vadd.f32 0.0, %v189
  %v191 = vpop.f32.mrb[0].mxu0
  %v192 = vadd.f32 0.0, %v191
  %193 = vmatprep.mubr.f32.mxu0 0.0
  %194 = vmatmul.mubr.f32.gmra.mrb[0].mxu0 %v91
  %v195 = vpop.f32.mrb[0].mxu0
  %v196 = vadd.f32 0.0, %v195
  %v197 = vpop.f32.mrb[0].mxu0
  %v198 = vadd.f32 0.0, %v197
  %199 = vmatprep.mubr.f32.mxu0 0.0
  %200 = vmatmul.mubr.f32.gmra.mrb[0].mxu0 %v94
  %v201 = vpop.f32.mrb[0].mxu0
  %v202 = vadd.f32 0.0, %v201
  %v203 = vpop.f32.mrb[0].mxu0
  %v204 = vadd.f32 0.0, %v203
  %205 = vmatprep.mubr.f32.mxu0 0.0
  %206 = vmatmul.mubr.f32.gmra.mrb[0].mxu0 %v97
  %v207 = vpop.f32.mrb[0].mxu0
  %v208 = vadd.f32 0.0, %v207
  %v209 = vpop.f32.mrb[0].mxu0
  %v210 = vadd.f32 0.0, %v209
  %211 = vdwg.mxu0
  %212 = vmatprep.subr.mxu0 %v69
  %213 = vmatpush1.msra.mxu0 %v68
  %214 = vmatprep.subr.mxu0 %v73
  %215 = vmatpush1.msra.mxu0 %v72
  %216 = vmatprep.subr.mxu0 0.0
  %217 = vmatpush1.msra.mxu0 0.0
  %218 = vmatprep.subr.mxu0 0.0
  %219 = vmatpush1.msra.mxu0 0.0
  %220 = vmatprep.subr.mxu0 0.0
  %221 = vmatpush1.msra.mxu0 0.0
  %222 = vmatprep.subr.mxu0 0.0
  %223 = vmatpush1.msra.mxu0 0.0
  %224 = vmatprep.subr.mxu0 0.0
  %225 = vmatpush1.msra.mxu0 0.0
  %226 = vmatprep.subr.mxu0 0.0
  %227 = vmatpush1.msra.mxu0 0.0
  %228 = vmatprep.subr.mxu0 0.0
  %229 = vmatpush1.msra.mxu0 0.0
  %230 = vmatprep.subr.mxu0 0.0
  %231 = vmatpush1.msra.mxu0 0.0
  %232 = vmatprep.subr.mxu0 0.0
  %233 = vmatpush1.msra.mxu0 0.0
  %234 = vmatprep.subr.mxu0 0.0
  %235 = vmatpush1.msra.mxu0 0.0
  %236 = vmatprep.subr.mxu0 0.0
  %237 = vmatpush1.msra.mxu0 0.0
  %238 = vmatprep.subr.mxu0 0.0
  %239 = vmatpush1.msra.mxu0 0.0
  %240 = vmatprep.subr.mxu0 0.0
  %241 = vmatpush1.msra.mxu0 0.0
  %242 = vmatprep.subr.mxu0 0.0
  %243 = vmatpush1.msra.mxu0 0.0
  %244 = vmatprep.subr.mxu0 0.0
  %245 = vmatpush1.msra.mxu0 0.0
  %246 = vmatprep.subr.mxu0 0.0
  %247 = vmatpush1.msra.mxu0 0.0
  %248 = vmatprep.subr.mxu0 0.0
  %249 = vmatpush1.msra.mxu0 0.0
  %250 = vmatprep.subr.mxu0 0.0
  %251 = vmatpush1.msra.mxu0 0.0
  %252 = vmatprep.subr.mxu0 0.0
  %253 = vmatpush1.msra.mxu0 0.0
  %254 = vmatprep.subr.mxu0 0.0
  %255 = vmatpush1.msra.mxu0 0.0
  %256 = vmatprep.subr.mxu0 0.0
  %257 = vmatpush1.msra.mxu0 0.0
  %258 = vmatprep.subr.mxu0 0.0
  %259 = vmatpush1.msra.mxu0 0.0
  %260 = vmatprep.subr.mxu0 0.0
  %261 = vmatpush1.msra.mxu0 0.0
  %262 = vmatprep.subr.mxu0 0.0
  %263 = vmatpush1.msra.mxu0 0.0
  %264 = vmatprep.subr.mxu0 0.0
  %265 = vmatpush1.msra.mxu0 0.0
  %266 = vmatprep.subr.mxu0 0.0
  %267 = vmatpush1.msra.mxu0 0.0
  %268 = vmatprep.subr.mxu0 0.0
  %269 = vmatpush1.msra.mxu0 0.0
  %270 = vmatprep.subr.mxu0 0.0
  %271 = vmatpush1.msra.mxu0 0.0
  %272 = vmatprep.subr.mxu0 0.0
  %273 = vmatpush1.msra.mxu0 0.0
  %274 = vmatprep.subr.mxu0 0.0
  %275 = vmatpush1.msra.mxu0 0.0
  %276 = vmatprep.mubr.f32.mxu0 0.0
  %277 = vmatmul.mubr.f32.gmra.mrb[0].mxu0 %v76
  %v278 = vpop.f32.mrb[0].mxu0
  %v279 = vadd.f32 0.0, %v278
  %v280 = vpop.f32.mrb[0].mxu0
  %v281 = vadd.f32 0.0, %v280
  %282 = vmatprep.mubr.f32.mxu0 0.0
  %283 = vmatmul.mubr.f32.gmra.mrb[0].mxu0 %v79
  %v284 = vpop.f32.mrb[0].mxu0
  %v285 = vadd.f32 0.0, %v284
  %v286 = vpop.f32.mrb[0].mxu0
  %v287 = vadd.f32 0.0, %v286
  %288 = vmatprep.mubr.f32.mxu0 0.0
  %289 = vmatmul.mubr.f32.gmra.mrb[0].mxu0 %v82
  %v290 = vpop.f32.mrb[0].mxu0
  %v291 = vadd.f32 0.0, %v290
  %v292 = vpop.f32.mrb[0].mxu0
  %v293 = vadd.f32 0.0, %v292
  %294 = vmatprep.mubr.f32.mxu0 0.0
  %295 = vmatmul.mubr.f32.gmra.mrb[0].mxu0 %v85
  %v296 = vpop.f32.mrb[0].mxu0
  %v297 = vadd.f32 0.0, %v296
  %v298 = vpop.f32.mrb[0].mxu0
  %v299 = vadd.f32 0.0, %v298
  %300 = vmatprep.mubr.f32.mxu0 0.0
  %301 = vmatmul.mubr.f32.gmra.mrb[0].mxu0 %v88
  %v302 = vpop.f32.mrb[0].mxu0
  %v303 = vadd.f32 0.0, %v302
  %v304 = vpop.f32.mrb[0].mxu0
  %v305 = vadd.f32 0.0, %v304
  %306 = vmatprep.mubr.f32.mxu0 0.0
  %307 = vmatmul.mubr.f32.gmra.mrb[0].mxu0 %v91
  %v308 = vpop.f32.mrb[0].mxu0
  %v309 = vadd.f32 0.0, %v308
  %v310 = vpop.f32.mrb[0].mxu0
  %v311 = vadd.f32 0.0, %v310
  %312 = vmatprep.mubr.f32.mxu0 0.0
  %313 = vmatmul.mubr.f32.gmra.mrb[0].mxu0 %v94
  %v314 = vpop.f32.mrb[0].mxu0
  %v315 = vadd.f32 0.0, %v314
  %v316 = vpop.f32.mrb[0].mxu0
  %v317 = vadd.f32 0.0, %v316
  %318 = vmatprep.mubr.f32.mxu0 0.0
  %319 = vmatmul.mubr.f32.gmra.mrb[0].mxu0 %v97
  %v320 = vpop.f32.mrb[0].mxu0
  %v321 = vadd.f32 0.0, %v320
  %v322 = vpop.f32.mrb[0].mxu0
  %v323 = vadd.f32 0.0, %v322
  %324 = vdwg.mxu0
  %v326 = vsel %vm74, %v34, 0
  %v329 = vsel %vm74, %v35, 0
  %v332 = vsel %vm74, %v36, 0
  %v335 = vsel %vm74, %v37, 0
  %v338 = vsel %vm74, %v38, 0
  %v341 = vsel %vm74, %v39, 0
  %v344 = vsel %vm74, %v40, 0
  %v347 = vsel %vm74, %v41, 0
  %349 = vmatprep.subr.mxu0 %v59
  %350 = vmatpush1.msra.mxu0 %v58
  %351 = vmatprep.subr.mxu0 %v63
  %352 = vmatpush1.msra.mxu0 %v62
  %353 = vmatprep.subr.mxu0 0.0
  %354 = vmatpush1.msra.mxu0 0.0
  %355 = vmatprep.subr.mxu0 0.0
  %356 = vmatpush1.msra.mxu0 0.0
  %357 = vmatprep.subr.mxu0 0.0
  %358 = vmatpush1.msra.mxu0 0.0
  %359 = vmatprep.subr.mxu0 0.0
  %360 = vmatpush1.msra.mxu0 0.0
  %361 = vmatprep.subr.mxu0 0.0
  %362 = vmatpush1.msra.mxu0 0.0
  %363 = vmatprep.subr.mxu0 0.0
  %364 = vmatpush1.msra.mxu0 0.0
  %365 = vmatprep.subr.mxu0 0.0
  %366 = vmatpush1.msra.mxu0 0.0
  %367 = vmatprep.subr.mxu0 0.0
  %368 = vmatpush1.msra.mxu0 0.0
  %369 = vmatprep.subr.mxu0 0.0
  %370 = vmatpush1.msra.mxu0 0.0
  %371 = vmatprep.subr.mxu0 0.0
  %372 = vmatpush1.msra.mxu0 0.0
  %373 = vmatprep.subr.mxu0 0.0
  %374 = vmatpush1.msra.mxu0 0.0
  %375 = vmatprep.subr.mxu0 0.0
  %376 = vmatpush1.msra.mxu0 0.0
  %377 = vmatprep.subr.mxu0 0.0
  %378 = vmatpush1.msra.mxu0 0.0
  %379 = vmatprep.subr.mxu0 0.0
  %380 = vmatpush1.msra.mxu0 0.0
  %381 = vmatprep.subr.mxu0 0.0
  %382 = vmatpush1.msra.mxu0 0.0
  %383 = vmatprep.subr.mxu0 0.0
  %384 = vmatpush1.msra.mxu0 0.0
  %385 = vmatprep.subr.mxu0 0.0
  %386 = vmatpush1.msra.mxu0 0.0
  %387 = vmatprep.subr.mxu0 0.0
  %388 = vmatpush1.msra.mxu0 0.0
  %389 = vmatprep.subr.mxu0 0.0
  %390 = vmatpush1.msra.mxu0 0.0
  %391 = vmatprep.subr.mxu0 0.0
  %392 = vmatpush1.msra.mxu0 0.0
  %393 = vmatprep.subr.mxu0 0.0
  %394 = vmatpush1.msra.mxu0 0.0
  %395 = vmatprep.subr.mxu0 0.0
  %396 = vmatpush1.msra.mxu0 0.0
  %397 = vmatprep.subr.mxu0 0.0
  %398 = vmatpush1.msra.mxu0 0.0
  %399 = vmatprep.subr.mxu0 0.0
  %400 = vmatpush1.msra.mxu0 0.0
  %401 = vmatprep.subr.mxu0 0.0
  %402 = vmatpush1.msra.mxu0 0.0
  %403 = vmatprep.subr.mxu0 0.0
  %404 = vmatpush1.msra.mxu0 0.0
  %405 = vmatprep.subr.mxu0 0.0
  %406 = vmatpush1.msra.mxu0 0.0
  %407 = vmatprep.subr.mxu0 0.0
  %408 = vmatpush1.msra.mxu0 0.0
  %409 = vmatprep.subr.mxu0 0.0
  %410 = vmatpush1.msra.mxu0 0.0
  %411 = vmatprep.subr.mxu0 0.0
  %412 = vmatpush1.msra.mxu0 0.0
  %413 = vmatprep.mubr.f32.mxu0 0.0
  %414 = vmatmul.mubr.f32.gmra.mrb[0].mxu0 %v326
  %v415 = vpop.f32.mrb[0].mxu0
  %v416 = vadd.f32 %v166, %v415
  %v417 = vpop.f32.mrb[0].mxu0
  %v418 = vadd.f32 %v168, %v417
  %419 = vmatprep.mubr.f32.mxu0 0.0
  %420 = vmatmul.mubr.f32.gmra.mrb[0].mxu0 %v329
  %v421 = vpop.f32.mrb[0].mxu0
  %v422 = vadd.f32 %v172, %v421
  %v423 = vpop.f32.mrb[0].mxu0
  %v424 = vadd.f32 %v174, %v423
  %425 = vmatprep.mubr.f32.mxu0 0.0
  %426 = vmatmul.mubr.f32.gmra.mrb[0].mxu0 %v332
  %v427 = vpop.f32.mrb[0].mxu0
  %v428 = vadd.f32 %v178, %v427
  %v429 = vpop.f32.mrb[0].mxu0
  %v430 = vadd.f32 %v180, %v429
  %431 = vmatprep.mubr.f32.mxu0 0.0
  %432 = vmatmul.mubr.f32.gmra.mrb[0].mxu0 %v335
  %v433 = vpop.f32.mrb[0].mxu0
  %v434 = vadd.f32 %v184, %v433
  %v435 = vpop.f32.mrb[0].mxu0
  %v436 = vadd.f32 %v186, %v435
  %437 = vmatprep.mubr.f32.mxu0 0.0
  %438 = vmatmul.mubr.f32.gmra.mrb[0].mxu0 %v338
  %v439 = vpop.f32.mrb[0].mxu0
  %v440 = vadd.f32 %v190, %v439
  %v441 = vpop.f32.mrb[0].mxu0
  %v442 = vadd.f32 %v192, %v441
  %443 = vmatprep.mubr.f32.mxu0 0.0
  %444 = vmatmul.mubr.f32.gmra.mrb[0].mxu0 %v341
  %v445 = vpop.f32.mrb[0].mxu0
  %v446 = vadd.f32 %v196, %v445
  %v447 = vpop.f32.mrb[0].mxu0
  %v448 = vadd.f32 %v198, %v447
  %449 = vmatprep.mubr.f32.mxu0 0.0
  %450 = vmatmul.mubr.f32.gmra.mrb[0].mxu0 %v344
  %v451 = vpop.f32.mrb[0].mxu0
  %v452 = vadd.f32 %v202, %v451
  %v453 = vpop.f32.mrb[0].mxu0
  %v454 = vadd.f32 %v204, %v453
  %455 = vmatprep.mubr.f32.mxu0 0.0
  %456 = vmatmul.mubr.f32.gmra.mrb[0].mxu0 %v347
  %v457 = vpop.f32.mrb[0].mxu0
  %v458 = vadd.f32 %v208, %v457
  %v459 = vpop.f32.mrb[0].mxu0
  %v460 = vadd.f32 %v210, %v459
  %461 = vdwg.mxu0
  %462 = vmatprep.subr.mxu0 %v61
  %463 = vmatpush1.msra.mxu0 %v60
  %464 = vmatprep.subr.mxu0 %v65
  %465 = vmatpush1.msra.mxu0 %v64
  %466 = vmatprep.subr.mxu0 0.0
  %467 = vmatpush1.msra.mxu0 0.0
  %468 = vmatprep.subr.mxu0 0.0
  %469 = vmatpush1.msra.mxu0 0.0
  %470 = vmatprep.subr.mxu0 0.0
  %471 = vmatpush1.msra.mxu0 0.0
  %472 = vmatprep.subr.mxu0 0.0
  %473 = vmatpush1.msra.mxu0 0.0
  %474 = vmatprep.subr.mxu0 0.0
  %475 = vmatpush1.msra.mxu0 0.0
  %476 = vmatprep.subr.mxu0 0.0
  %477 = vmatpush1.msra.mxu0 0.0
  %478 = vmatprep.subr.mxu0 0.0
  %479 = vmatpush1.msra.mxu0 0.0
  %480 = vmatprep.subr.mxu0 0.0
  %481 = vmatpush1.msra.mxu0 0.0
  %482 = vmatprep.subr.mxu0 0.0
  %483 = vmatpush1.msra.mxu0 0.0
  %484 = vmatprep.subr.mxu0 0.0
  %485 = vmatpush1.msra.mxu0 0.0
  %486 = vmatprep.subr.mxu0 0.0
  %487 = vmatpush1.msra.mxu0 0.0
  %488 = vmatprep.subr.mxu0 0.0
  %489 = vmatpush1.msra.mxu0 0.0
  %490 = vmatprep.subr.mxu0 0.0
  %491 = vmatpush1.msra.mxu0 0.0
  %492 = vmatprep.subr.mxu0 0.0
  %493 = vmatpush1.msra.mxu0 0.0
  %494 = vmatprep.subr.mxu0 0.0
  %495 = vmatpush1.msra.mxu0 0.0
  %496 = vmatprep.subr.mxu0 0.0
  %497 = vmatpush1.msra.mxu0 0.0
  %498 = vmatprep.subr.mxu0 0.0
  %499 = vmatpush1.msra.mxu0 0.0
  %500 = vmatprep.subr.mxu0 0.0
  %501 = vmatpush1.msra.mxu0 0.0
  %502 = vmatprep.subr.mxu0 0.0
  %503 = vmatpush1.msra.mxu0 0.0
  %504 = vmatprep.subr.mxu0 0.0
  %505 = vmatpush1.msra.mxu0 0.0
  %506 = vmatprep.subr.mxu0 0.0
  %507 = vmatpush1.msra.mxu0 0.0
  %508 = vmatprep.subr.mxu0 0.0
  %509 = vmatpush1.msra.mxu0 0.0
  %510 = vmatprep.subr.mxu0 0.0
  %511 = vmatpush1.msra.mxu0 0.0
  %512 = vmatprep.subr.mxu0 0.0
  %513 = vmatpush1.msra.mxu0 0.0
  %514 = vmatprep.subr.mxu0 0.0
  %515 = vmatpush1.msra.mxu0 0.0
  %516 = vmatprep.subr.mxu0 0.0
  %517 = vmatpush1.msra.mxu0 0.0
  %518 = vmatprep.subr.mxu0 0.0
  %519 = vmatpush1.msra.mxu0 0.0
  %520 = vmatprep.subr.mxu0 0.0
  %521 = vmatpush1.msra.mxu0 0.0
  %522 = vmatprep.subr.mxu0 0.0
  %523 = vmatpush1.msra.mxu0 0.0
  %524 = vmatprep.subr.mxu0 0.0
  %525 = vmatpush1.msra.mxu0 0.0
  %526 = vmatprep.mubr.f32.mxu0 0.0
  %527 = vmatmul.mubr.f32.gmra.mrb[0].mxu0 %v326
  %v528 = vpop.f32.mrb[0].mxu0
  %v529 = vadd.f32 %v279, %v528
  %v530 = vpop.f32.mrb[0].mxu0
  %v531 = vadd.f32 %v281, %v530
  %532 = vmatprep.mubr.f32.mxu0 0.0
  %533 = vmatmul.mubr.f32.gmra.mrb[0].mxu0 %v329
  %v534 = vpop.f32.mrb[0].mxu0
  %v535 = vadd.f32 %v285, %v534
  %v536 = vpop.f32.mrb[0].mxu0
  %v537 = vadd.f32 %v287, %v536
  %538 = vmatprep.mubr.f32.mxu0 0.0
  %539 = vmatmul.mubr.f32.gmra.mrb[0].mxu0 %v332
  %v540 = vpop.f32.mrb[0].mxu0
  %v541 = vadd.f32 %v291, %v540
  %v542 = vpop.f32.mrb[0].mxu0
  %v543 = vadd.f32 %v293, %v542
  %544 = vmatprep.mubr.f32.mxu0 0.0
  %545 = vmatmul.mubr.f32.gmra.mrb[0].mxu0 %v335
  %v546 = vpop.f32.mrb[0].mxu0
  %v547 = vadd.f32 %v297, %v546
  %v548 = vpop.f32.mrb[0].mxu0
  %v549 = vadd.f32 %v299, %v548
  %550 = vmatprep.mubr.f32.mxu0 0.0
  %551 = vmatmul.mubr.f32.gmra.mrb[0].mxu0 %v338
  %v552 = vpop.f32.mrb[0].mxu0
  %v553 = vadd.f32 %v303, %v552
  %v554 = vpop.f32.mrb[0].mxu0
  %v555 = vadd.f32 %v305, %v554
  %556 = vmatprep.mubr.f32.mxu0 0.0
  %557 = vmatmul.mubr.f32.gmra.mrb[0].mxu0 %v341
  %v558 = vpop.f32.mrb[0].mxu0
  %v559 = vadd.f32 %v309, %v558
  %v560 = vpop.f32.mrb[0].mxu0
  %v561 = vadd.f32 %v311, %v560
  %562 = vmatprep.mubr.f32.mxu0 0.0
  %563 = vmatmul.mubr.f32.gmra.mrb[0].mxu0 %v344
  %v564 = vpop.f32.mrb[0].mxu0
  %v565 = vadd.f32 %v315, %v564
  %v566 = vpop.f32.mrb[0].mxu0
  %v567 = vadd.f32 %v317, %v566
  %568 = vmatprep.mubr.f32.mxu0 0.0
  %569 = vmatmul.mubr.f32.gmra.mrb[0].mxu0 %v347
  %v570 = vpop.f32.mrb[0].mxu0
  %v571 = vadd.f32 %v321, %v570
  %v572 = vpop.f32.mrb[0].mxu0
  %v573 = vadd.f32 %v323, %v572
  %574 = vdwg.mxu0
  %576 = vset.pattern.permute.xlu0 0
  %577 = vperm.xlu0 %576, %v50
  %v578 = vpop.permute.xlu0 %577
  %581 = vset.pattern.permute.xlu0 0
  %582 = vperm.xlu0 %581, %v51
  %v583 = vpop.permute.xlu0 %582
  %586 = vset.pattern.permute.xlu0 0
  %587 = vperm.xlu0 %586, %v52
  %v588 = vpop.permute.xlu0 %587
  %591 = vset.pattern.permute.xlu0 0
  %592 = vperm.xlu0 %591, %v53
  %v593 = vpop.permute.xlu0 %592
  %596 = vset.pattern.permute.xlu0 0
  %597 = vperm.xlu0 %596, %v54
  %v598 = vpop.permute.xlu0 %597
  %601 = vset.pattern.permute.xlu0 0
  %602 = vperm.xlu0 %601, %v55
  %v603 = vpop.permute.xlu0 %602
  %606 = vset.pattern.permute.xlu0 0
  %607 = vperm.xlu0 %606, %v56
  %v608 = vpop.permute.xlu0 %607
  %611 = vset.pattern.permute.xlu0 0
  %612 = vperm.xlu0 %611, %v57
  %v613 = vpop.permute.xlu0 %612
  %v615 = vadd.f32 %v416, %v578
  %v616 = vadd.f32 %v418, %v578
  %v617 = vadd.f32 %v529, %v578
  %v618 = vadd.f32 %v531, %v578
  %v619 = vadd.f32 %v422, %v583
  %v620 = vadd.f32 %v424, %v583
  %v621 = vadd.f32 %v535, %v583
  %v622 = vadd.f32 %v537, %v583
  %v623 = vadd.f32 %v428, %v588
  %v624 = vadd.f32 %v430, %v588
  %v625 = vadd.f32 %v541, %v588
  %v626 = vadd.f32 %v543, %v588
  %v627 = vadd.f32 %v434, %v593
  %v628 = vadd.f32 %v436, %v593
  %v629 = vadd.f32 %v547, %v593
  %v630 = vadd.f32 %v549, %v593
  %v631 = vadd.f32 %v440, %v598
  %v632 = vadd.f32 %v442, %v598
  %v633 = vadd.f32 %v553, %v598
  %v634 = vadd.f32 %v555, %v598
  %v635 = vadd.f32 %v446, %v603
  %v636 = vadd.f32 %v448, %v603
  %v637 = vadd.f32 %v559, %v603
  %v638 = vadd.f32 %v561, %v603
  %v639 = vadd.f32 %v452, %v608
  %v640 = vadd.f32 %v454, %v608
  %v641 = vadd.f32 %v565, %v608
  %v642 = vadd.f32 %v567, %v608
  %v643 = vadd.f32 %v458, %v613
  %v644 = vadd.f32 %v460, %v613
  %v645 = vadd.f32 %v571, %v613
  %v646 = vadd.f32 %v573, %v613
  %v647 = vmax.f32 %v615, 0.0
  %v648 = vmax.f32 %v616, 0.0
  %v649 = vmax.f32 %v617, 0.0
  %v650 = vmax.f32 %v618, 0.0
  %v651 = vmax.f32 %v619, 0.0
  %v652 = vmax.f32 %v620, 0.0
  %v653 = vmax.f32 %v621, 0.0
  %v654 = vmax.f32 %v622, 0.0
  %v655 = vmax.f32 %v623, 0.0
  %v656 = vmax.f32 %v624, 0.0
  %v657 = vmax.f32 %v625, 0.0
  %v658 = vmax.f32 %v626, 0.0
  %v659 = vmax.f32 %v627, 0.0
  %v660 = vmax.f32 %v628, 0.0
  %v661 = vmax.f32 %v629, 0.0
  %v662 = vmax.f32 %v630, 0.0
  %v663 = vmax.f32 %v631, 0.0
  %v664 = vmax.f32 %v632, 0.0
  %v665 = vmax.f32 %v633, 0.0
  %v666 = vmax.f32 %v634, 0.0
  %v667 = vmax.f32 %v635, 0.0
  %v668 = vmax.f32 %v636, 0.0
  %v669 = vmax.f32 %v637, 0.0
  %v670 = vmax.f32 %v638, 0.0
  %v671 = vmax.f32 %v639, 0.0
  %v672 = vmax.f32 %v640, 0.0
  %v673 = vmax.f32 %v641, 0.0
  %v674 = vmax.f32 %v642, 0.0
  %v675 = vmax.f32 %v643, 0.0
  %v676 = vmax.f32 %v644, 0.0
  %v677 = vmax.f32 %v645, 0.0
  %v678 = vmax.f32 %v646, 0.0
  %v679 = vld [vmem:[%s5] sm:$0xff]
  %v680 = vld [vmem:[%s5 + $0x8] sm:$0xff]
  %v681 = vld [vmem:[%s5 + $0x10] sm:$0xff]
  %v682 = vld [vmem:[%s5 + $0x18] sm:$0xff]
  %v683 = vld [vmem:[%s6] sm:$0xff]
  %v684 = vld [vmem:[%s6 + $0x8] sm:$0xff]
  %v685 = vld [vmem:[%s6 + $0x10] sm:$0xff]
  %v686 = vld [vmem:[%s6 + $0x18] sm:$0xff]
  %688 = vset.pattern.permute.xlu0 0
  %689 = vperm.xlu0 %688, %v683
  %v690 = vpop.permute.xlu0 %689
  %693 = vset.pattern.permute.xlu0 0
  %694 = vperm.xlu0 %693, %v684
  %v695 = vpop.permute.xlu0 %694
  %698 = vset.pattern.permute.xlu0 0
  %699 = vperm.xlu0 %698, %v685
  %v700 = vpop.permute.xlu0 %699
  %703 = vset.pattern.permute.xlu0 0
  %704 = vperm.xlu0 %703, %v686
  %v705 = vpop.permute.xlu0 %704
  %vm707 = vcmask 523264
  %v709 = vsel %vm707, %v679, 0
  %v712 = vsel %vm707, %v680, 0
  %v715 = vsel %vm707, %v681, 0
  %v718 = vsel %vm707, %v682, 0
  %720 = vmatprep.subr.mxu0 %v648
  %721 = vmatpush1.msra.mxu0 %v647
  %722 = vmatprep.subr.mxu0 %v652
  %723 = vmatpush1.msra.mxu0 %v651
  %724 = vmatprep.subr.mxu0 %v656
  %725 = vmatpush1.msra.mxu0 %v655
  %726 = vmatprep.subr.mxu0 %v660
  %727 = vmatpush1.msra.mxu0 %v659
  %728 = vmatprep.subr.mxu0 %v664
  %729 = vmatpush1.msra.mxu0 %v663
  %730 = vmatprep.subr.mxu0 %v668
  %731 = vmatpush1.msra.mxu0 %v667
  %732 = vmatprep.subr.mxu0 %v672
  %733 = vmatpush1.msra.mxu0 %v671
  %734 = vmatprep.subr.mxu0 %v676
  %735 = vmatpush1.msra.mxu0 %v675
  %736 = vmatprep.subr.mxu0 0.0
  %737 = vmatpush1.msra.mxu0 0.0
  %738 = vmatprep.subr.mxu0 0.0
  %739 = vmatpush1.msra.mxu0 0.0
  %740 = vmatprep.subr.mxu0 0.0
  %741 = vmatpush1.msra.mxu0 0.0
  %742 = vmatprep.subr.mxu0 0.0
  %743 = vmatpush1.msra.mxu0 0.0
  %744 = vmatprep.subr.mxu0 0.0
  %745 = vmatpush1.msra.mxu0 0.0
  %746 = vmatprep.subr.mxu0 0.0
  %747 = vmatpush1.msra.mxu0 0.0
  %748 = vmatprep.subr.mxu0 0.0
  %749 = vmatpush1.msra.mxu0 0.0
  %750 = vmatprep.subr.mxu0 0.0
  %751 = vmatpush1.msra.mxu0 0.0
  %752 = vmatprep.subr.mxu0 0.0
  %753 = vmatpush1.msra.mxu0 0.0
  %754 = vmatprep.subr.mxu0 0.0
  %755 = vmatpush1.msra.mxu0 0.0
  %756 = vmatprep.subr.mxu0 0.0
  %757 = vmatpush1.msra.mxu0 0.0
  %758 = vmatprep.subr.mxu0 0.0
  %759 = vmatpush1.msra.mxu0 0.0
  %760 = vmatprep.subr.mxu0 0.0
  %761 = vmatpush1.msra.mxu0 0.0
  %762 = vmatprep.subr.mxu0 0.0
  %763 = vmatpush1.msra.mxu0 0.0
  %764 = vmatprep.subr.mxu0 0.0
  %765 = vmatpush1.msra.mxu0 0.0
  %766 = vmatprep.subr.mxu0 0.0
  %767 = vmatpush1.msra.mxu0 0.0
  %768 = vmatprep.subr.mxu0 0.0
  %769 = vmatpush1.msra.mxu0 0.0
  %770 = vmatprep.subr.mxu0 0.0
  %771 = vmatpush1.msra.mxu0 0.0
  %772 = vmatprep.subr.mxu0 0.0
  %773 = vmatpush1.msra.mxu0 0.0
  %774 = vmatprep.subr.mxu0 0.0
  %775 = vmatpush1.msra.mxu0 0.0
  %776 = vmatprep.subr.mxu0 0.0
  %777 = vmatpush1.msra.mxu0 0.0
  %778 = vmatprep.subr.mxu0 0.0
  %779 = vmatpush1.msra.mxu0 0.0
  %780 = vmatprep.subr.mxu0 0.0
  %781 = vmatpush1.msra.mxu0 0.0
  %782 = vmatprep.subr.mxu0 0.0
  %783 = vmatpush1.msra.mxu0 0.0
  %784 = vmatprep.mubr.f32.mxu0 0.0
  %785 = vmatmul.mubr.f32.gmra.mrb[0].mxu0 %v709
  %v786 = vpop.f32.mrb[0].mxu0
  %v787 = vadd.f32 %v690, %v786
  %v788 = vpop.f32.mrb[0].mxu0
  %v789 = vadd.f32 %v690, %v788
  %790 = vmatprep.mubr.f32.mxu0 0.0
  %791 = vmatmul.mubr.f32.gmra.mrb[0].mxu0 %v712
  %v792 = vpop.f32.mrb[0].mxu0
  %v793 = vadd.f32 %v695, %v792
  %v794 = vpop.f32.mrb[0].mxu0
  %v795 = vadd.f32 %v695, %v794
  %796 = vmatprep.mubr.f32.mxu0 0.0
  %797 = vmatmul.mubr.f32.gmra.mrb[0].mxu0 %v715
  %v798 = vpop.f32.mrb[0].mxu0
  %v799 = vadd.f32 %v700, %v798
  %v800 = vpop.f32.mrb[0].mxu0
  %v801 = vadd.f32 %v700, %v800
  %802 = vmatprep.mubr.f32.mxu0 0.0
  %803 = vmatmul.mubr.f32.gmra.mrb[0].mxu0 %v718
  %v804 = vpop.f32.mrb[0].mxu0
  %v805 = vadd.f32 %v705, %v804
  %v806 = vpop.f32.mrb[0].mxu0
  %v807 = vadd.f32 %v705, %v806
  %808 = vdwg.mxu0
  %809 = vmatprep.subr.mxu0 %v650
  %810 = vmatpush1.msra.mxu0 %v649
  %811 = vmatprep.subr.mxu0 %v654
  %812 = vmatpush1.msra.mxu0 %v653
  %813 = vmatprep.subr.mxu0 %v658
  %814 = vmatpush1.msra.mxu0 %v657
  %815 = vmatprep.subr.mxu0 %v662
  %816 = vmatpush1.msra.mxu0 %v661
  %817 = vmatprep.subr.mxu0 %v666
  %818 = vmatpush1.msra.mxu0 %v665
  %819 = vmatprep.subr.mxu0 %v670
  %820 = vmatpush1.msra.mxu0 %v669
  %821 = vmatprep.subr.mxu0 %v674
  %822 = vmatpush1.msra.mxu0 %v673
  %823 = vmatprep.subr.mxu0 %v678
  %824 = vmatpush1.msra.mxu0 %v677
  %825 = vmatprep.subr.mxu0 0.0
  %826 = vmatpush1.msra.mxu0 0.0
  %827 = vmatprep.subr.mxu0 0.0
  %828 = vmatpush1.msra.mxu0 0.0
  %829 = vmatprep.subr.mxu0 0.0
  %830 = vmatpush1.msra.mxu0 0.0
  %831 = vmatprep.subr.mxu0 0.0
  %832 = vmatpush1.msra.mxu0 0.0
  %833 = vmatprep.subr.mxu0 0.0
  %834 = vmatpush1.msra.mxu0 0.0
  %835 = vmatprep.subr.mxu0 0.0
  %836 = vmatpush1.msra.mxu0 0.0
  %837 = vmatprep.subr.mxu0 0.0
  %838 = vmatpush1.msra.mxu0 0.0
  %839 = vmatprep.subr.mxu0 0.0
  %840 = vmatpush1.msra.mxu0 0.0
  %841 = vmatprep.subr.mxu0 0.0
  %842 = vmatpush1.msra.mxu0 0.0
  %843 = vmatprep.subr.mxu0 0.0
  %844 = vmatpush1.msra.mxu0 0.0
  %845 = vmatprep.subr.mxu0 0.0
  %846 = vmatpush1.msra.mxu0 0.0
  %847 = vmatprep.subr.mxu0 0.0
  %848 = vmatpush1.msra.mxu0 0.0
  %849 = vmatprep.subr.mxu0 0.0
  %850 = vmatpush1.msra.mxu0 0.0
  %851 = vmatprep.subr.mxu0 0.0
  %852 = vmatpush1.msra.mxu0 0.0
  %853 = vmatprep.subr.mxu0 0.0
  %854 = vmatpush1.msra.mxu0 0.0
  %855 = vmatprep.subr.mxu0 0.0
  %856 = vmatpush1.msra.mxu0 0.0
  %857 = vmatprep.subr.mxu0 0.0
  %858 = vmatpush1.msra.mxu0 0.0
  %859 = vmatprep.subr.mxu0 0.0
  %860 = vmatpush1.msra.mxu0 0.0
  %861 = vmatprep.subr.mxu0 0.0
  %862 = vmatpush1.msra.mxu0 0.0
  %863 = vmatprep.subr.mxu0 0.0
  %864 = vmatpush1.msra.mxu0 0.0
  %865 = vmatprep.subr.mxu0 0.0
  %866 = vmatpush1.msra.mxu0 0.0
  %867 = vmatprep.subr.mxu0 0.0
  %868 = vmatpush1.msra.mxu0 0.0
  %869 = vmatprep.subr.mxu0 0.0
  %870 = vmatpush1.msra.mxu0 0.0
  %871 = vmatprep.subr.mxu0 0.0
  %872 = vmatpush1.msra.mxu0 0.0
  %873 = vmatprep.mubr.f32.mxu0 0.0
  %874 = vmatmul.mubr.f32.gmra.mrb[0].mxu0 %v709
  %v875 = vpop.f32.mrb[0].mxu0
  %v876 = vadd.f32 %v690, %v875
  %v877 = vpop.f32.mrb[0].mxu0
  %v878 = vadd.f32 %v690, %v877
  %879 = vmatprep.mubr.f32.mxu0 0.0
  %880 = vmatmul.mubr.f32.gmra.mrb[0].mxu0 %v712
  %v881 = vpop.f32.mrb[0].mxu0
  %v882 = vadd.f32 %v695, %v881
  %v883 = vpop.f32.mrb[0].mxu0
  %v884 = vadd.f32 %v695, %v883
  %885 = vmatprep.mubr.f32.mxu0 0.0
  %886 = vmatmul.mubr.f32.gmra.mrb[0].mxu0 %v715
  %v887 = vpop.f32.mrb[0].mxu0
  %v888 = vadd.f32 %v700, %v887
  %v889 = vpop.f32.mrb[0].mxu0
  %v890 = vadd.f32 %v700, %v889
  %891 = vmatprep.mubr.f32.mxu0 0.0
  %892 = vmatmul.mubr.f32.gmra.mrb[0].mxu0 %v718
  %v893 = vpop.f32.mrb[0].mxu0
  %v894 = vadd.f32 %v705, %v893
  %v895 = vpop.f32.mrb[0].mxu0
  %v896 = vadd.f32 %v705, %v895
  %897 = vdwg.mxu0
  %v898 = vmax.f32 %v787, 0.0
  %v899 = vmax.f32 %v789, 0.0
  %v900 = vmax.f32 %v876, 0.0
  %v901 = vmax.f32 %v878, 0.0
  %v902 = vmax.f32 %v793, 0.0
  %v903 = vmax.f32 %v795, 0.0
  %v904 = vmax.f32 %v882, 0.0
  %v905 = vmax.f32 %v884, 0.0
  %v906 = vmax.f32 %v799, 0.0
  %v907 = vmax.f32 %v801, 0.0
  %v908 = vmax.f32 %v888, 0.0
  %v909 = vmax.f32 %v890, 0.0
  %v910 = vmax.f32 %v805, 0.0
  %v911 = vmax.f32 %v807, 0.0
  %v912 = vmax.f32 %v894, 0.0
  %v913 = vmax.f32 %v896, 0.0
  %v914 = vld [vmem:[%s7] sm:$0xff]
  %v915 = vld [vmem:[%s7 + $0x8] sm:$0xff]
  %v916 = vld [vmem:[%s7 + $0x10] sm:$0xff]
  %v917 = vld [vmem:[%s7 + $0x18] sm:$0xff]
  %v918 = vld [vmem:[#allocation2] sm:$0x1]
  %920 = vset.pattern.permute.xlu0 0
  %921 = vperm.xlu0 %920, %v914
  %v922 = vpop.permute.xlu0 %921
  %925 = vset.pattern.permute.xlu0 0
  %926 = vperm.xlu0 %925, %v915
  %v927 = vpop.permute.xlu0 %926
  %930 = vset.pattern.permute.xlu0 0
  %931 = vperm.xlu0 %930, %v916
  %v932 = vpop.permute.xlu0 %931
  %935 = vset.pattern.permute.xlu0 0
  %936 = vperm.xlu0 %935, %v917
  %v937 = vpop.permute.xlu0 %936
  %v939 = vmul.f32 %v898, %v922
  %v940 = vmul.f32 %v899, %v922
  %v941 = vmul.f32 %v900, %v922
  %v942 = vmul.f32 %v901, %v922
  %v943 = vmul.f32 %v902, %v927
  %v944 = vmul.f32 %v903, %v927
  %v945 = vmul.f32 %v904, %v927
  %v946 = vmul.f32 %v905, %v927
  %v947 = vmul.f32 %v906, %v932
  %v948 = vmul.f32 %v907, %v932
  %v949 = vmul.f32 %v908, %v932
  %v950 = vmul.f32 %v909, %v932
  %v951 = vmul.f32 %v910, %v937
  %v952 = vmul.f32 %v911, %v937
  %v953 = vmul.f32 %v912, %v937
  %v954 = vmul.f32 %v913, %v937
  %v955 = vadd.f32 %v939, %v943
  %v956 = vadd.f32 %v955, %v947
  %v957 = vadd.f32 %v956, %v951
  %v958 = vrot.slane %v957, 4
  %v959 = vadd.f32 %v957, %v958
  %v960 = vrot.slane %v959, 2
  %v961 = vadd.f32 %v959, %v960
  %v962 = vrot.slane %v961, 1
  %v963 = vadd.f32 %v961, %v962
  %v964 = vadd.f32 %v940, %v944
  %v965 = vadd.f32 %v964, %v948
  %v966 = vadd.f32 %v965, %v952
  %v967 = vrot.slane %v966, 4
  %v968 = vadd.f32 %v966, %v967
  %v969 = vrot.slane %v968, 2
  %v970 = vadd.f32 %v968, %v969
  %v971 = vrot.slane %v970, 1
  %v972 = vadd.f32 %v970, %v971
  %v973 = vadd.f32 %v941, %v945
  %v974 = vadd.f32 %v973, %v949
  %v975 = vadd.f32 %v974, %v953
  %v976 = vrot.slane %v975, 4
  %v977 = vadd.f32 %v975, %v976
  %v978 = vrot.slane %v977, 2
  %v979 = vadd.f32 %v977, %v978
  %v980 = vrot.slane %v979, 1
  %v981 = vadd.f32 %v979, %v980
  %v982 = vadd.f32 %v942, %v946
  %v983 = vadd.f32 %v982, %v950
  %v984 = vadd.f32 %v983, %v954
  %v985 = vrot.slane %v984, 4
  %v986 = vadd.f32 %v984, %v985
  %v987 = vrot.slane %v986, 2
  %v988 = vadd.f32 %v986, %v987
  %v989 = vrot.slane %v988, 1
  %v990 = vadd.f32 %v988, %v989
  %992 = vset.pattern.permute.xlu0 0
  %993 = vperm.xlu0 %992, %v918
  %v994 = vpop.permute.xlu0 %993
  %v996 = vlaneseq
  %v997 = vshrl.u32 %v996, 7
  %v998 = vsub.s32 0, %v997
  %v999 = vrot.slane %v994, %v998
  %v1000 = vadd.f32 %v963, %v999
  %v1001 = vadd.f32 %v972, %v999
  %v1002 = vadd.f32 %v981, %v999
  %v1003 = vadd.f32 %v990, %v999
  %v1004 = vxor.u32 %v1000, 2147483648
  %v1005 = vxor.u32 %v1001, 2147483648
  %v1006 = vxor.u32 %v1002, 2147483648
  %v1007 = vxor.u32 %v1003, 2147483648
  %v1008 = vmul.f32 %v1004, 1.442695
  %v1009 = vpow.pop %v1008
  %v1010 = vmul.f32 %v1005, 1.442695
  %v1011 = vpow.pop %v1010
  %v1012 = vmul.f32 %v1006, 1.442695
  %v1013 = vpow.pop %v1012
  %v1014 = vmul.f32 %v1007, 1.442695
  %v1015 = vpow.pop %v1014
  %v1016 = vadd.f32 %v1009, 1.0
  %v1017 = vadd.f32 %v1011, 1.0
  %v1018 = vadd.f32 %v1013, 1.0
  %v1019 = vadd.f32 %v1015, 1.0
  %v1020 = vrcp.pop %v1016
  %v1021 = vmul.f32 1.0, %v1020
  %v1022 = vrcp.pop %v1017
  %v1023 = vmul.f32 1.0, %v1022
  %v1024 = vrcp.pop %v1018
  %v1025 = vmul.f32 1.0, %v1024
  %v1026 = vrcp.pop %v1019
  %v1027 = vmul.f32 1.0, %v1026
  %v1032 = vcombine.low %v1021, %v1023
  %v1033 = vcombine.low %v1025, %v1027
  %v1035 = vunpack.c.l.s4 1966171168
  %v1036 = vunpack.c.0.s8 %v1035
  %v1037 = vlaneseq
  %v1038 = vshrl.u32 %v1037, 7
  %v1039 = vsub.s32 %v1036, %v1038
  %v1040 = vrot.slane %v1032, %v1039
  %v1042 = vunpack.c.l.s4 1966171168
  %v1043 = vunpack.c.0.s8 %v1042
  %v1044 = vlaneseq
  %v1045 = vshrl.u32 %v1044, 7
  %v1046 = vsub.s32 %v1043, %v1045
  %v1047 = vrot.slane %v1033, %v1046
  %v1048 = vcombine.low %v1040, %v1047
  %v1050 = vunpack.c.l.s4 1966171168
  %v1051 = vunpack.c.0.s8 %v1050
  %v1052 = vlaneseq
  %v1053 = vshrl.u32 %v1052, 7
  %v1054 = vsub.s32 %v1051, %v1053
  %v1055 = vrot.slane %v1048, %v1054
  %v1057 = vlaneseq
  %vm1058 = vcmp.ge.s32.totalorder %v1057, 0
  %vm1059 = vcmp.lt.s32.totalorder %v1057, 512
  %vm1060 = vmand %vm1058, %vm1059
  %1061 = vst.msk [vmem:[%s9] sm:$0xf] %vm1060, %v1055
  // Predicated region
  $region38: #{neural_cf_forward.1} parent=0 // pred_check
    _
  $region39: #{neural_cf_forward.1} parent=0 // pred_check_branch
    %1063 = sbr.rel (0) target = $region41
  $region40: #{neural_cf_forward.1} parent=0 // pred_region
    _
  $region41: #{neural_cf_forward.1} parent=0 // pred_fallthru
    _
  // Predicated region
  $region42: #{neural_cf_forward.1} parent=0 // pred_check
    _
  $region43: #{neural_cf_forward.1} parent=0 // pred_check_branch
    %1065 = sbr.rel (0) target = $region45
  $region44: #{neural_cf_forward.1} parent=0 // pred_region
    _
  $region45: #{neural_cf_forward.1} parent=0 // pred_fallthru
    _

</llo_original>
